<compile_context>
chip_gen: v5e
topology: v5e:2x2
jax: 0.10.0
libtpu: 0.0.40
codegen_flags: <defaults>
</compile_context>

<pallas_src>
import functools

import jax
import jax.numpy as jnp
from jax.experimental import pallas as pl
from jax.experimental.pallas import tpu as pltpu

_LANE = 128
_SUBLANE = 8


def _round_up(x, m):
    return ((x + m - 1) // m) * m


def _device_generation():
    """Best-effort TPU generation (4/5/6/7) from the device kind string."""
    try:
        kind = jax.devices()[0].device_kind.lower()
    except Exception:
        return 0
    if "v7" in kind or "tpu7" in kind:
        return 7
    for g in (6, 5, 4):
        if f"v{g}" in kind:
            return g
    return 0


def _vmem_limit_bytes(gen):
    """Generation-aware scoped-VMEM limit: ~85% of physical, capped at 110 MiB."""
    cap = None
    try:
        info = pltpu.get_tpu_info()
        for attr in ("vmem_capacity_bytes", "vmem_size_bytes", "vmem_bytes"):
            val = getattr(info, attr, None)
            if val:
                cap = int(val)
                break
    except Exception:
        cap = None
    if cap is None:
        cap = (64 if gen >= 7 else 128) * 1024 * 1024
    return int(min(cap * 0.85, 110 * 1024 * 1024))


def _mlp_kernel(num_hidden, lane_dense_out, *refs):
    # refs = (x_ref, w0, b0, ..., w_{H-1}, b_{H-1}, w_last, b_last, o_ref)
    x_ref = refs[0]
    o_ref = refs[-1]
    p = refs[1:-1]

    h = x_ref[...]                                    # (tb, d_in_pad), f32
    for li in range(num_hidden):
        w_ref = p[2 * li]                             # (d_in_pad, d_out_pad)
        b_ref = p[2 * li + 1]                         # (1, d_out_pad), f32
        z = jnp.dot(h.astype(w_ref.dtype), w_ref[...],
                    preferred_element_type=jnp.float32)   # MXU, f32 accumulate
        h = jnp.maximum(z + b_ref[...], 0.0)          # bias + ReLU on VPU, f32

    # Head Linear(d_last, 1) + Sigmoid: VPU multiply + XLU cross-lane reduce
    # (an N=1 matmul would burn a whole MXU pass for one useful column).
    w_last = p[2 * num_hidden]                        # (1, d_last_pad), f32
    b_last = p[2 * num_hidden + 1]                    # (1, 1), f32
    z_col = jnp.sum(h * w_last[...], axis=-1, keepdims=True) + b_last[...]
    if lane_dense_out:
        # One small XLU transpose (tb,1)->(1,tb) so the store is lane-dense.
        o_ref[0] = jax.nn.sigmoid(jnp.transpose(z_col)).astype(o_ref.dtype)
    else:
        o_ref[...] = jax.nn.sigmoid(z_col).astype(o_ref.dtype)


def regressor_forward(x, params, *, tile_batch=1024, compute_dtype=jnp.float32):
    """Fused Regressor MLP forward as a single batch-tiled Pallas kernel.

    x:      (batch, in_features) float32
    params: list of (W, b) with W: (in_i, out_i)  (i.e. PyTorch weight.T),
            b: (1, out_i) or (out_i,). Last entry is the Linear(., 1) head.
    """
    batch, in_features = x.shape
    num_hidden = len(params) - 1
    gen = _device_generation()

    # ---- Input feature dim padded to a sublane multiple (dense vld / MXU K) ----
    in_feat_pad = _round_up(in_features, _SUBLANE)
    x_in = jnp.asarray(x, jnp.float32)                # stays f32 in HBM
    if in_feat_pad != in_features:
        x_in = jnp.pad(x_in, ((0, 0), (0, in_feat_pad - in_features)))

    # ---- Lane-pad hidden widths; cast hidden weights once; head stays f32 ----
    wide_mult = 256 if gen >= 6 else 128              # v6e/v7x MXU is 2x256^2
    pad_params = []
    prev_out_pad = in_feat_pad
    for li, (w, b) in enumerate(params):
        w = jnp.asarray(w, jnp.float32)
        b = jnp.reshape(jnp.asarray(b, jnp.float32), (1, -1))
        d_in, d_out = w.shape
        is_last = li == num_hidden
        if is_last:
            d_out_pad = d_out                         # == 1
        elif d_out > _LANE:
            d_out_pad = _round_up(d_out, wide_mult)
        else:
            d_out_pad = _round_up(d_out, _LANE)       # don't inflate tiny layers
        w_p = jnp.zeros((prev_out_pad, d_out_pad), jnp.float32)
        w_p = w_p.at[:d_in, :d_out].set(w)
        b_p = jnp.zeros((1, d_out_pad), jnp.float32).at[:, :d_out].set(b)
        if is_last:
            w_p = w_p.T                               # (1, d_last_pad) row, f32
        else:
            w_p = w_p.astype(compute_dtype)           # hidden weights may be bf16
        pad_params.append((w_p, b_p))                 # biases stay f32 (v5e VPU)
        prev_out_pad = d_out_pad

    # ---- Batch tile: lane-multiple, >= 2 tiles when possible (v7x megacore) ----
    if batch <= _LANE:
        tb = _round_up(max(min(batch, tile_batch), 1), _SUBLANE)
    else:
        half = _round_up(pl.cdiv(batch, 2), _LANE)
        tb = _round_up(min(tile_batch, half), _LANE)

    # ---- VMEM budget check: shrink tb rather than spill ----
    vmem_limit = _vmem_limit_bytes(gen)
    param_bytes = sum(w.size * w.dtype.itemsize + b.size * b.dtype.itemsize
                      for w, b in pad_params)
    max_width = max([in_feat_pad] + [w.shape[-1] for w, _ in pad_params[:num_hidden]])

    def _working_bytes(t):
        # double-buffered x tile + out tile + ~3 activation-sized temporaries
        return 2 * t * in_feat_pad * 4 + 2 * t * 4 + 3 * t * max_width * 4

    budget = int(vmem_limit * 0.75)
    while tb > _LANE and 2 * param_bytes + _working_bytes(tb) > budget:
        tb = _round_up(tb // 2, _LANE)
    # TODO(synk): if 2*param_bytes alone exceeds the budget (very wide
    # layer_sizes on v7x's 64 MiB VMEM), switch to a layer-streamed
    # pltpu.emit_pipeline instead of the all-weights-resident design.

    num_tiles = pl.cdiv(batch, tb)

    flat_params = []
    for w_p, b_p in pad_params:
        flat_params.extend((w_p, b_p))

    # ---- Cost estimate (helps XLA schedule the custom call) ----
    flops = 0
    prev = in_feat_pad
    for li, (w_p, _) in enumerate(pad_params):
        width = w_p.shape[-1]
        if li < num_hidden:
            flops += 2 * batch * prev * width
            prev = width
        else:
            flops += 2 * batch * width
    bytes_accessed = (x_in.size * 4 + batch * 4
                      + sum(p.size * p.dtype.itemsize for p in flat_params))
    cost = pl.CostEstimate(flops=int(flops), transcendentals=int(batch),
                           bytes_accessed=int(bytes_accessed))

    def _run(lane_dense, single_buffer):
        # Constant-index params stay VMEM-resident; only x / out tiles stream.
        spec_kwargs = {"pipeline_mode": pl.Buffered(1)} if single_buffer else {}
        in_specs = [pl.BlockSpec((tb, in_feat_pad), lambda i: (i, 0))]
        for w_p, b_p in pad_params:
            in_specs.append(pl.BlockSpec(w_p.shape, lambda i: (0, 0), **spec_kwargs))
            in_specs.append(pl.BlockSpec(b_p.shape, lambda i: (0, 0), **spec_kwargs))
        if lane_dense:
            out_specs = pl.BlockSpec((1, 1, tb), lambda i: (i, 0, 0))
            out_shape = jax.ShapeDtypeStruct((num_tiles, 1, tb), jnp.float32)
        else:
            out_specs = pl.BlockSpec((tb, 1), lambda i: (i, 0))
            out_shape = jax.ShapeDtypeStruct((num_tiles * tb, 1), jnp.float32)

        fn = pl.pallas_call(
            functools.partial(_mlp_kernel, num_hidden, lane_dense),
            grid=(num_tiles,),
            in_specs=in_specs,
            out_specs=out_specs,
            out_shape=out_shape,
            compiler_params=pltpu.CompilerParams(
                dimension_semantics=("parallel",),     # megacore sharding on v7x
                vmem_limit_bytes=vmem_limit,
            ),
            cost_estimate=cost,
        )
        out = fn(x_in, *flat_params)
        if lane_dense:
            out = out.reshape(num_tiles * tb, 1)       # contiguous, cheap plumbing
        return out[:batch]

    # Preferred config first; fall back gracefully if a spec feature is not
    # supported by the installed Pallas/Mosaic version.
    last_err = None
    for lane_dense, single_buffer in ((True, True), (True, False), (False, False)):
        try:
            return _run(lane_dense, single_buffer)
        except Exception as err:                       # noqa: BLE001 - fallback path
            last_err = err
    raise last_err


def init_regressor_params(key, regressor_layers):
    """Deterministic synthetic init mirroring build_regressor's shapes.

    regressor_layers: list of (in_features, out_features) for the hidden Linears.
    Appends the final Linear(last_out, 1) just like build_regressor.
    """
    all_layer_shapes = list(regressor_layers) + [(regressor_layers[-1][1], 1)]
    params = []
    for (fan_in, fan_out) in all_layer_shapes:
        key, kw, kb = jax.random.split(key, 3)
        bound = 1.0 / jnp.sqrt(jnp.float32(fan_in))
        # Stored pre-transposed: (in, out) so kernel does x @ W.
        w = jax.random.uniform(kw, (fan_in, fan_out), jnp.float32, -bound, bound)
        b = jax.random.uniform(kb, (1, fan_out), jnp.float32, -bound, bound)
        params.append((w, b))
    return params


def regressor_reference(x, params):
    """Plain-JAX reference for correctness checking."""
    h = x
    for i, (w, b) in enumerate(params):
        z = h @ w + jnp.reshape(b, (1, -1))
        h = jnp.maximum(z, 0.0) if i < len(params) - 1 else jax.nn.sigmoid(z)
    return h


if __name__ == "__main__":
    key = jax.random.PRNGKey(0)

    # Shapes consistent with the module: Regressor([(32, 64), (64, 32)])
    regressor_layers = [(32, 64), (64, 32)]
    in_features = regressor_layers[0][0]

    kx, kp, kx2, kp3, kx3 = jax.random.split(key, 5)
    params = init_regressor_params(kp, regressor_layers)

    # --- tiny batch, single tile, f32: tight correctness check ---
    batch = 8
    x = jax.random.normal(kx, (batch, in_features), jnp.float32)
    y_ref = regressor_reference(x, params)
    y = jax.block_until_ready(regressor_forward(x, params))
    assert y.shape == (batch, 1), y.shape
    assert jnp.allclose(y, y_ref, atol=1e-5, rtol=1e-5), (
        f"max abs err {jnp.max(jnp.abs(y - y_ref))}")

    # --- ragged multi-tile batch, default tiling (tb=256, grid=2), f32 ---
    batch2 = 300
    x2 = jax.random.normal(kx2, (batch2, in_features), jnp.float32)
    y2_ref = regressor_reference(x2, params)
    y2 = jax.block_until_ready(regressor_forward(x2, params))
    assert y2.shape == (batch2, 1), y2.shape
    assert jnp.allclose(y2, y2_ref, atol=1e-5, rtol=1e-5), (
        f"max abs err {jnp.max(jnp.abs(y2 - y2_ref))}")

    # --- forced small tiles (tb=128, grid=3), f32 ---
    y2b = jax.block_until_ready(regressor_forward(x2, params, tile_batch=128))
    assert y2b.shape == (batch2, 1), y2b.shape
    assert jnp.allclose(y2b, y2_ref, atol=1e-5, rtol=1e-5), (
        f"max abs err {jnp.max(jnp.abs(y2b - y2_ref))}")

    # --- bf16 hidden-weight fast path (x and head stay f32), loose check ---
    ybf = jax.block_until_ready(
        regressor_forward(x2, params, tile_batch=128, compute_dtype=jnp.bfloat16))
    assert ybf.shape == (batch2, 1), ybf.shape
    assert jnp.allclose(ybf, y2_ref, atol=2e-2, rtol=2e-2), (
        f"max abs err {jnp.max(jnp.abs(ybf - y2_ref))}")

    # --- non-multiple-of-8 in_features (exercises feature-dim padding) ---
    layers3 = [(30, 64), (64, 32)]
    params3 = init_regressor_params(kp3, layers3)
    batch3 = 37
    x3 = jax.random.normal(kx3, (batch3, layers3[0][0]), jnp.float32)
    y3_ref = regressor_reference(x3, params3)
    y3 = jax.block_until_ready(regressor_forward(x3, params3))
    assert y3.shape == (batch3, 1), y3.shape
    assert jnp.allclose(y3, y3_ref, atol=1e-5, rtol=1e-5), (
        f"max abs err {jnp.max(jnp.abs(y3 - y3_ref))}")

    print("KERNEL_OK")
</pallas_src>

<mosaic_0001>
module attributes {stable_mosaic.version = 11 : i64} {
  func.func @_mlp_kernel(%arg0: i32, %arg1: memref<8x32xf32, #tpu.memory_space<vmem>>, %arg2: memref<32x128xf32, #tpu.memory_space<vmem>>, %arg3: memref<1x128xf32, #tpu.memory_space<vmem>>, %arg4: memref<128x128xf32, #tpu.memory_space<vmem>>, %arg5: memref<1x128xf32, #tpu.memory_space<vmem>>, %arg6: memref<1x128xf32, #tpu.memory_space<vmem>>, %arg7: memref<1x1xf32, #tpu.memory_space<vmem>>, %arg8: memref<1x1x8xf32, #tpu.memory_space<vmem>>) attributes {dimension_semantics = [#tpu.dimension_semantics<parallel>], iteration_bounds = array<i64: 1>, scalar_prefetch = 0 : i64, scratch_operands = 0 : i64, tpu.core_type = #tpu.core_type<tc>, window_params = [{transform_indices = @transform_0, window_bounds = array<i64: 8, 32>}, {pipeline_mode = #tpu.pipeline_mode<synchronous>, transform_indices = @transform_1, window_bounds = array<i64: 32, 128>}, {pipeline_mode = #tpu.pipeline_mode<synchronous>, transform_indices = @transform_2, window_bounds = array<i64: 1, 128>}, {pipeline_mode = #tpu.pipeline_mode<synchronous>, transform_indices = @transform_3, window_bounds = array<i64: 128, 128>}, {pipeline_mode = #tpu.pipeline_mode<synchronous>, transform_indices = @transform_4, window_bounds = array<i64: 1, 128>}, {pipeline_mode = #tpu.pipeline_mode<synchronous>, transform_indices = @transform_5, window_bounds = array<i64: 1, 128>}, {pipeline_mode = #tpu.pipeline_mode<synchronous>, transform_indices = @transform_6, window_bounds = array<i64: 1, 1>}, {transform_indices = @transform_7, window_bounds = array<i64: 1, 1, 8>}]} {
    %c0 = arith.constant 0 : index
    %c0_0 = arith.constant 0 : index
    %0 = vector.load %arg1[%c0, %c0_0] : memref<8x32xf32, #tpu.memory_space<vmem>>, vector<8x32xf32>
    %c0_1 = arith.constant 0 : index
    %c0_2 = arith.constant 0 : index
    %1 = vector.load %arg2[%c0_1, %c0_2] : memref<32x128xf32, #tpu.memory_space<vmem>>, vector<32x128xf32>
    %cst = arith.constant dense<0.000000e+00> : vector<8x128xf32>
    %2 = tpu.matmul %0, %1, %cst {dimension_numbers = #tpu.dot_dimension_numbers<[1], [0], [0], [1], [0, 0, 1, 1], [], []>} : vector<8x32xf32>, vector<32x128xf32>, vector<8x128xf32> -> vector<8x128xf32>
    %c0_3 = arith.constant 0 : index
    %c0_4 = arith.constant 0 : index
    %3 = vector.load %arg3[%c0_3, %c0_4] : memref<1x128xf32, #tpu.memory_space<vmem>>, vector<1x128xf32>
    %4 = vector.broadcast %3 : vector<1x128xf32> to vector<8x128xf32>
    %5 = arith.addf %2, %4 : vector<8x128xf32>
    %cst_5 = arith.constant 0.000000e+00 : f32
    %6 = vector.broadcast %cst_5 : f32 to vector<8x128xf32>
    %7 = arith.maximumf %5, %6 : vector<8x128xf32>
    %c0_6 = arith.constant 0 : index
    %c0_7 = arith.constant 0 : index
    %8 = vector.load %arg4[%c0_6, %c0_7] : memref<128x128xf32, #tpu.memory_space<vmem>>, vector<128x128xf32>
    %cst_8 = arith.constant dense<0.000000e+00> : vector<8x128xf32>
    %9 = tpu.matmul %7, %8, %cst_8 {dimension_numbers = #tpu.dot_dimension_numbers<[1], [0], [0], [1], [0, 0, 1, 1], [], []>} : vector<8x128xf32>, vector<128x128xf32>, vector<8x128xf32> -> vector<8x128xf32>
    %c0_9 = arith.constant 0 : index
    %c0_10 = arith.constant 0 : index
    %10 = vector.load %arg5[%c0_9, %c0_10] : memref<1x128xf32, #tpu.memory_space<vmem>>, vector<1x128xf32>
    %11 = vector.broadcast %10 : vector<1x128xf32> to vector<8x128xf32>
    %12 = arith.addf %9, %11 : vector<8x128xf32>
    %cst_11 = arith.constant 0.000000e+00 : f32
    %13 = vector.broadcast %cst_11 : f32 to vector<8x128xf32>
    %14 = arith.maximumf %12, %13 : vector<8x128xf32>
    %c0_12 = arith.constant 0 : index
    %c0_13 = arith.constant 0 : index
    %15 = vector.load %arg6[%c0_12, %c0_13] : memref<1x128xf32, #tpu.memory_space<vmem>>, vector<1x128xf32>
    %16 = vector.broadcast %15 : vector<1x128xf32> to vector<8x128xf32>
    %17 = arith.mulf %14, %16 : vector<8x128xf32>
    %cst_14 = arith.constant dense<0.000000e+00> : vector<8xf32>
    %18 = vector.multi_reduction <add>, %17, %cst_14 [1] : vector<8x128xf32> to vector<8xf32>
    %19 = vector.shape_cast %18 : vector<8xf32> to vector<8x1xf32>
    %c0_15 = arith.constant 0 : index
    %c0_16 = arith.constant 0 : index
    %20 = vector.load %arg7[%c0_15, %c0_16] : memref<1x1xf32, #tpu.memory_space<vmem>>, vector<1x1xf32>
    %21 = vector.broadcast %20 : vector<1x1xf32> to vector<8x1xf32>
    %22 = arith.addf %19, %21 : vector<8x1xf32>
    %23 = tpu.transpose %22, [1, 0] : vector<8x1xf32> -> vector<1x8xf32>
    %24 = arith.negf %23 : vector<1x8xf32>
    %25 = math.exp %24 : vector<1x8xf32>
    %cst_17 = arith.constant 1.000000e+00 : f32
    %26 = vector.broadcast %cst_17 : f32 to vector<1x8xf32>
    %27 = arith.addf %26, %25 : vector<1x8xf32>
    %28 = arith.divf %26, %27 : vector<1x8xf32>
    %c0_18 = arith.constant 0 : index
    %c0_19 = arith.constant 0 : index
    %c0_20 = arith.constant 0 : index
    %29 = vector.load %arg8[%c0_18, %c0_19, %c0_20] : memref<1x1x8xf32, #tpu.memory_space<vmem>>, vector<1x1x8xf32>
    %30 = vector.shape_cast %29 : vector<1x1x8xf32> to vector<1x8xf32>
    %31 = vector.shape_cast %28 : vector<1x8xf32> to vector<1x1x8xf32>
    tpu.vector_store %arg8[%c0_18, %c0_19, %c0_20], %31 {strides = array<i32>} : memref<1x1x8xf32, #tpu.memory_space<vmem>>, vector<1x1x8xf32>,
    return
  }
  func.func @transform_0(%arg0: i32) -> (i32, i32) {
    %c0_i32 = arith.constant 0 : i32
    %c0_i32_0 = arith.constant 0 : i32
    return %arg0, %c0_i32 : i32, i32
  }
  func.func @transform_1(%arg0: i32) -> (i32, i32) {
    %c0_i32 = arith.constant 0 : i32
    %c0_i32_0 = arith.constant 0 : i32
    %c0_i32_1 = arith.constant 0 : i32
    return %c0_i32, %c0_i32_0 : i32, i32
  }
  func.func @transform_2(%arg0: i32) -> (i32, i32) {
    %c0_i32 = arith.constant 0 : i32
    %c0_i32_0 = arith.constant 0 : i32
    %c0_i32_1 = arith.constant 0 : i32
    return %c0_i32, %c0_i32_0 : i32, i32
  }
  func.func @transform_3(%arg0: i32) -> (i32, i32) {
    %c0_i32 = arith.constant 0 : i32
    %c0_i32_0 = arith.constant 0 : i32
    %c0_i32_1 = arith.constant 0 : i32
    return %c0_i32, %c0_i32_0 : i32, i32
  }
  func.func @transform_4(%arg0: i32) -> (i32, i32) {
    %c0_i32 = arith.constant 0 : i32
    %c0_i32_0 = arith.constant 0 : i32
    %c0_i32_1 = arith.constant 0 : i32
    return %c0_i32, %c0_i32_0 : i32, i32
  }
  func.func @transform_5(%arg0: i32) -> (i32, i32) {
    %c0_i32 = arith.constant 0 : i32
    %c0_i32_0 = arith.constant 0 : i32
    %c0_i32_1 = arith.constant 0 : i32
    return %c0_i32, %c0_i32_0 : i32, i32
  }
  func.func @transform_6(%arg0: i32) -> (i32, i32) {
    %c0_i32 = arith.constant 0 : i32
    %c0_i32_0 = arith.constant 0 : i32
    %c0_i32_1 = arith.constant 0 : i32
    return %c0_i32, %c0_i32_0 : i32, i32
  }
  func.func @transform_7(%arg0: i32) -> (i32, i32, i32) {
    %c0_i32 = arith.constant 0 : i32
    %c0_i32_0 = arith.constant 0 : i32
    %c0_i32_1 = arith.constant 0 : i32
    return %arg0, %c0_i32, %c0_i32_0 : i32, i32, i32
  }
}

module attributes {stable_mosaic.version = 11 : i64} {
  func.func @_mlp_kernel(%arg0: i32, %arg1: memref<8x32xf32, #tpu.memory_space<vmem>>, %arg2: memref<32x128xf32, #tpu.memory_space<vmem>>, %arg3: memref<1x128xf32, #tpu.memory_space<vmem>>, %arg4: memref<128x128xf32, #tpu.memory_space<vmem>>, %arg5: memref<1x128xf32, #tpu.memory_space<vmem>>, %arg6: memref<1x128xf32, #tpu.memory_space<vmem>>, %arg7: memref<1x1xf32, #tpu.memory_space<vmem>>, %arg8: memref<1x1x8xf32, #tpu.memory_space<vmem>>) attributes {dimension_semantics = [#tpu.dimension_semantics<parallel>], iteration_bounds = array<i64: 1>, scalar_prefetch = 0 : i64, scratch_operands = 0 : i64, tpu.core_type = #tpu.core_type<tc>, window_params = [{transform_indices = @transform_0, window_bounds = array<i64: 8, 32>}, {pipeline_mode = #tpu.pipeline_mode<synchronous>, transform_indices = @transform_1, window_bounds = array<i64: 32, 128>}, {pipeline_mode = #tpu.pipeline_mode<synchronous>, transform_indices = @transform_2, window_bounds = array<i64: 1, 128>}, {pipeline_mode = #tpu.pipeline_mode<synchronous>, transform_indices = @transform_3, window_bounds = array<i64: 128, 128>}, {pipeline_mode = #tpu.pipeline_mode<synchronous>, transform_indices = @transform_4, window_bounds = array<i64: 1, 128>}, {pipeline_mode = #tpu.pipeline_mode<synchronous>, transform_indices = @transform_5, window_bounds = array<i64: 1, 128>}, {pipeline_mode = #tpu.pipeline_mode<synchronous>, transform_indices = @transform_6, window_bounds = array<i64: 1, 1>}, {transform_indices = @transform_7, window_bounds = array<i64: 1, 1, 8>}]} {
    %c0 = arith.constant 0 : index
    %c0_0 = arith.constant 0 : index
    %0 = vector.load %arg1[%c0, %c0_0] : memref<8x32xf32, #tpu.memory_space<vmem>>, vector<8x32xf32>
    %c0_1 = arith.constant 0 : index
    %c0_2 = arith.constant 0 : index
    %1 = vector.load %arg2[%c0_1, %c0_2] : memref<32x128xf32, #tpu.memory_space<vmem>>, vector<32x128xf32>
    %cst = arith.constant dense<0.000000e+00> : vector<8x128xf32>
    %2 = tpu.matmul %0, %1, %cst {dimension_numbers = #tpu.dot_dimension_numbers<[1], [0], [0], [1], [0, 0, 1, 1], [], []>} : vector<8x32xf32>, vector<32x128xf32>, vector<8x128xf32> -> vector<8x128xf32>
    %c0_3 = arith.constant 0 : index
    %c0_4 = arith.constant 0 : index
    %3 = vector.load %arg3[%c0_3, %c0_4] : memref<1x128xf32, #tpu.memory_space<vmem>>, vector<1x128xf32>
    %4 = vector.broadcast %3 : vector<1x128xf32> to vector<8x128xf32>
    %5 = arith.addf %2, %4 : vector<8x128xf32>
    %cst_5 = arith.constant 0.000000e+00 : f32
    %6 = vector.broadcast %cst_5 : f32 to vector<8x128xf32>
    %7 = arith.maximumf %5, %6 : vector<8x128xf32>
    %c0_6 = arith.constant 0 : index
    %c0_7 = arith.constant 0 : index
    %8 = vector.load %arg4[%c0_6, %c0_7] : memref<128x128xf32, #tpu.memory_space<vmem>>, vector<128x128xf32>
    %cst_8 = arith.constant dense<0.000000e+00> : vector<8x128xf32>
    %9 = tpu.matmul %7, %8, %cst_8 {dimension_numbers = #tpu.dot_dimension_numbers<[1], [0], [0], [1], [0, 0, 1, 1], [], []>} : vector<8x128xf32>, vector<128x128xf32>, vector<8x128xf32> -> vector<8x128xf32>
    %c0_9 = arith.constant 0 : index
    %c0_10 = arith.constant 0 : index
    %10 = vector.load %arg5[%c0_9, %c0_10] : memref<1x128xf32, #tpu.memory_space<vmem>>, vector<1x128xf32>
    %11 = vector.broadcast %10 : vector<1x128xf32> to vector<8x128xf32>
    %12 = arith.addf %9, %11 : vector<8x128xf32>
    %cst_11 = arith.constant 0.000000e+00 : f32
    %13 = vector.broadcast %cst_11 : f32 to vector<8x128xf32>
    %14 = arith.maximumf %12, %13 : vector<8x128xf32>
    %c0_12 = arith.constant 0 : index
    %c0_13 = arith.constant 0 : index
    %15 = vector.load %arg6[%c0_12, %c0_13] : memref<1x128xf32, #tpu.memory_space<vmem>>, vector<1x128xf32>
    %16 = vector.broadcast %15 : vector<1x128xf32> to vector<8x128xf32>
    %17 = arith.mulf %14, %16 : vector<8x128xf32>
    %cst_14 = arith.constant dense<0.000000e+00> : vector<8xf32>
    %18 = vector.multi_reduction <add>, %17, %cst_14 [1] : vector<8x128xf32> to vector<8xf32>
    %19 = vector.shape_cast %18 : vector<8xf32> to vector<8x1xf32>
    %c0_15 = arith.constant 0 : index
    %c0_16 = arith.constant 0 : index
    %20 = vector.load %arg7[%c0_15, %c0_16] : memref<1x1xf32, #tpu.memory_space<vmem>>, vector<1x1xf32>
    %21 = vector.broadcast %20 : vector<1x1xf32> to vector<8x1xf32>
    %22 = arith.addf %19, %21 : vector<8x1xf32>
    %23 = tpu.transpose %22, [1, 0] : vector<8x1xf32> -> vector<1x8xf32>
    %24 = arith.negf %23 : vector<1x8xf32>
    %25 = math.exp %24 : vector<1x8xf32>
    %cst_17 = arith.constant 1.000000e+00 : f32
    %26 = vector.broadcast %cst_17 : f32 to vector<1x8xf32>
    %27 = arith.addf %26, %25 : vector<1x8xf32>
    %28 = arith.divf %26, %27 : vector<1x8xf32>
    %c0_18 = arith.constant 0 : index
    %c0_19 = arith.constant 0 : index
    %c0_20 = arith.constant 0 : index
    %29 = vector.load %arg8[%c0_18, %c0_19, %c0_20] : memref<1x1x8xf32, #tpu.memory_space<vmem>>, vector<1x1x8xf32>
    %30 = vector.shape_cast %29 : vector<1x1x8xf32> to vector<1x8xf32>
    %31 = vector.shape_cast %28 : vector<1x8xf32> to vector<1x1x8xf32>
    tpu.vector_store %arg8[%c0_18, %c0_19, %c0_20], %31 {strides = array<i32>} : memref<1x1x8xf32, #tpu.memory_space<vmem>>, vector<1x1x8xf32>,
    return
  }
  func.func @transform_0(%arg0: i32) -> (i32, i32) {
    %c0_i32 = arith.constant 0 : i32
    %c0_i32_0 = arith.constant 0 : i32
    return %arg0, %c0_i32 : i32, i32
  }
  func.func @transform_1(%arg0: i32) -> (i32, i32) {
    %c0_i32 = arith.constant 0 : i32
    %c0_i32_0 = arith.constant 0 : i32
    %c0_i32_1 = arith.constant 0 : i32
    return %c0_i32, %c0_i32_0 : i32, i32
  }
  func.func @transform_2(%arg0: i32) -> (i32, i32) {
    %c0_i32 = arith.constant 0 : i32
    %c0_i32_0 = arith.constant 0 : i32
    %c0_i32_1 = arith.constant 0 : i32
    return %c0_i32, %c0_i32_0 : i32, i32
  }
  func.func @transform_3(%arg0: i32) -> (i32, i32) {
    %c0_i32 = arith.constant 0 : i32
    %c0_i32_0 = arith.constant 0 : i32
    %c0_i32_1 = arith.constant 0 : i32
    return %c0_i32, %c0_i32_0 : i32, i32
  }
  func.func @transform_4(%arg0: i32) -> (i32, i32) {
    %c0_i32 = arith.constant 0 : i32
    %c0_i32_0 = arith.constant 0 : i32
    %c0_i32_1 = arith.constant 0 : i32
    return %c0_i32, %c0_i32_0 : i32, i32
  }
  func.func @transform_5(%arg0: i32) -> (i32, i32) {
    %c0_i32 = arith.constant 0 : i32
    %c0_i32_0 = arith.constant 0 : i32
    %c0_i32_1 = arith.constant 0 : i32
    return %c0_i32, %c0_i32_0 : i32, i32
  }
  func.func @transform_6(%arg0: i32) -> (i32, i32) {
    %c0_i32 = arith.constant 0 : i32
    %c0_i32_0 = arith.constant 0 : i32
    %c0_i32_1 = arith.constant 0 : i32
    return %c0_i32, %c0_i32_0 : i32, i32
  }
  func.func @transform_7(%arg0: i32) -> (i32, i32, i32) {
    %c0_i32 = arith.constant 0 : i32
    %c0_i32_0 = arith.constant 0 : i32
    %c0_i32_1 = arith.constant 0 : i32
    return %arg0, %c0_i32, %c0_i32_0 : i32, i32, i32
  }
}

module attributes {stable_mosaic.version = 11 : i64} {
  func.func @_mlp_kernel(%arg0: i32, %arg1: memref<8x32xf32, #tpu.memory_space<vmem>>, %arg2: memref<32x128xf32, #tpu.memory_space<vmem>>, %arg3: memref<1x128xf32, #tpu.memory_space<vmem>>, %arg4: memref<128x128xf32, #tpu.memory_space<vmem>>, %arg5: memref<1x128xf32, #tpu.memory_space<vmem>>, %arg6: memref<1x128xf32, #tpu.memory_space<vmem>>, %arg7: memref<1x1xf32, #tpu.memory_space<vmem>>, %arg8: memref<8x1xf32, #tpu.memory_space<vmem>>) attributes {dimension_semantics = [#tpu.dimension_semantics<parallel>], iteration_bounds = array<i64: 1>, scalar_prefetch = 0 : i64, scratch_operands = 0 : i64, tpu.core_type = #tpu.core_type<tc>, window_params = [{transform_indices = @transform_0, window_bounds = array<i64: 8, 32>}, {pipeline_mode = #tpu.pipeline_mode<synchronous>, transform_indices = @transform_1, window_bounds = array<i64: 32, 128>}, {pipeline_mode = #tpu.pipeline_mode<synchronous>, transform_indices = @transform_2, window_bounds = array<i64: 1, 128>}, {pipeline_mode = #tpu.pipeline_mode<synchronous>, transform_indices = @transform_3, window_bounds = array<i64: 128, 128>}, {pipeline_mode = #tpu.pipeline_mode<synchronous>, transform_indices = @transform_4, window_bounds = array<i64: 1, 128>}, {pipeline_mode = #tpu.pipeline_mode<synchronous>, transform_indices = @transform_5, window_bounds = array<i64: 1, 128>}, {pipeline_mode = #tpu.pipeline_mode<synchronous>, transform_indices = @transform_6, window_bounds = array<i64: 1, 1>}, {transform_indices = @transform_7, window_bounds = array<i64: 8, 1>}]} {
    %c0 = arith.constant 0 : index
    %c0_0 = arith.constant 0 : index
    %0 = vector.load %arg1[%c0, %c0_0] : memref<8x32xf32, #tpu.memory_space<vmem>>, vector<8x32xf32>
    %c0_1 = arith.constant 0 : index
    %c0_2 = arith.constant 0 : index
    %1 = vector.load %arg2[%c0_1, %c0_2] : memref<32x128xf32, #tpu.memory_space<vmem>>, vector<32x128xf32>
    %cst = arith.constant dense<0.000000e+00> : vector<8x128xf32>
    %2 = tpu.matmul %0, %1, %cst {dimension_numbers = #tpu.dot_dimension_numbers<[1], [0], [0], [1], [0, 0, 1, 1], [], []>} : vector<8x32xf32>, vector<32x128xf32>, vector<8x128xf32> -> vector<8x128xf32>
    %c0_3 = arith.constant 0 : index
    %c0_4 = arith.constant 0 : index
    %3 = vector.load %arg3[%c0_3, %c0_4] : memref<1x128xf32, #tpu.memory_space<vmem>>, vector<1x128xf32>
    %4 = vector.broadcast %3 : vector<1x128xf32> to vector<8x128xf32>
    %5 = arith.addf %2, %4 : vector<8x128xf32>
    %cst_5 = arith.constant 0.000000e+00 : f32
    %6 = vector.broadcast %cst_5 : f32 to vector<8x128xf32>
    %7 = arith.maximumf %5, %6 : vector<8x128xf32>
    %c0_6 = arith.constant 0 : index
    %c0_7 = arith.constant 0 : index
    %8 = vector.load %arg4[%c0_6, %c0_7] : memref<128x128xf32, #tpu.memory_space<vmem>>, vector<128x128xf32>
    %cst_8 = arith.constant dense<0.000000e+00> : vector<8x128xf32>
    %9 = tpu.matmul %7, %8, %cst_8 {dimension_numbers = #tpu.dot_dimension_numbers<[1], [0], [0], [1], [0, 0, 1, 1], [], []>} : vector<8x128xf32>, vector<128x128xf32>, vector<8x128xf32> -> vector<8x128xf32>
    %c0_9 = arith.constant 0 : index
    %c0_10 = arith.constant 0 : index
    %10 = vector.load %arg5[%c0_9, %c0_10] : memref<1x128xf32, #tpu.memory_space<vmem>>, vector<1x128xf32>
    %11 = vector.broadcast %10 : vector<1x128xf32> to vector<8x128xf32>
    %12 = arith.addf %9, %11 : vector<8x128xf32>
    %cst_11 = arith.constant 0.000000e+00 : f32
    %13 = vector.broadcast %cst_11 : f32 to vector<8x128xf32>
    %14 = arith.maximumf %12, %13 : vector<8x128xf32>
    %c0_12 = arith.constant 0 : index
    %c0_13 = arith.constant 0 : index
    %15 = vector.load %arg6[%c0_12, %c0_13] : memref<1x128xf32, #tpu.memory_space<vmem>>, vector<1x128xf32>
    %16 = vector.broadcast %15 : vector<1x128xf32> to vector<8x128xf32>
    %17 = arith.mulf %14, %16 : vector<8x128xf32>
    %cst_14 = arith.constant dense<0.000000e+00> : vector<8xf32>
    %18 = vector.multi_reduction <add>, %17, %cst_14 [1] : vector<8x128xf32> to vector<8xf32>
    %19 = vector.shape_cast %18 : vector<8xf32> to vector<8x1xf32>
    %c0_15 = arith.constant 0 : index
    %c0_16 = arith.constant 0 : index
    %20 = vector.load %arg7[%c0_15, %c0_16] : memref<1x1xf32, #tpu.memory_space<vmem>>, vector<1x1xf32>
    %21 = vector.broadcast %20 : vector<1x1xf32> to vector<8x1xf32>
    %22 = arith.addf %19, %21 : vector<8x1xf32>
    %23 = arith.negf %22 : vector<8x1xf32>
    %24 = math.exp %23 : vector<8x1xf32>
    %cst_17 = arith.constant 1.000000e+00 : f32
    %25 = vector.broadcast %cst_17 : f32 to vector<8x1xf32>
    %26 = arith.addf %25, %24 : vector<8x1xf32>
    %27 = arith.divf %25, %26 : vector<8x1xf32>
    %c0_18 = arith.constant 0 : index
    %c0_19 = arith.constant 0 : index
    %28 = vector.load %arg8[%c0_18, %c0_19] : memref<8x1xf32, #tpu.memory_space<vmem>>, vector<8x1xf32>
    tpu.vector_store %arg8[%c0_18, %c0_19], %27 {strides = array<i32>} : memref<8x1xf32, #tpu.memory_space<vmem>>, vector<8x1xf32>,
    return
  }
  func.func @transform_0(%arg0: i32) -> (i32, i32) {
    %c0_i32 = arith.constant 0 : i32
    %c0_i32_0 = arith.constant 0 : i32
    return %arg0, %c0_i32 : i32, i32
  }
  func.func @transform_1(%arg0: i32) -> (i32, i32) {
    %c0_i32 = arith.constant 0 : i32
    %c0_i32_0 = arith.constant 0 : i32
    %c0_i32_1 = arith.constant 0 : i32
    return %c0_i32, %c0_i32_0 : i32, i32
  }
  func.func @transform_2(%arg0: i32) -> (i32, i32) {
    %c0_i32 = arith.constant 0 : i32
    %c0_i32_0 = arith.constant 0 : i32
    %c0_i32_1 = arith.constant 0 : i32
    return %c0_i32, %c0_i32_0 : i32, i32
  }
  func.func @transform_3(%arg0: i32) -> (i32, i32) {
    %c0_i32 = arith.constant 0 : i32
    %c0_i32_0 = arith.constant 0 : i32
    %c0_i32_1 = arith.constant 0 : i32
    return %c0_i32, %c0_i32_0 : i32, i32
  }
  func.func @transform_4(%arg0: i32) -> (i32, i32) {
    %c0_i32 = arith.constant 0 : i32
    %c0_i32_0 = arith.constant 0 : i32
    %c0_i32_1 = arith.constant 0 : i32
    return %c0_i32, %c0_i32_0 : i32, i32
  }
  func.func @transform_5(%arg0: i32) -> (i32, i32) {
    %c0_i32 = arith.constant 0 : i32
    %c0_i32_0 = arith.constant 0 : i32
    %c0_i32_1 = arith.constant 0 : i32
    return %c0_i32, %c0_i32_0 : i32, i32
  }
  func.func @transform_6(%arg0: i32) -> (i32, i32) {
    %c0_i32 = arith.constant 0 : i32
    %c0_i32_0 = arith.constant 0 : i32
    %c0_i32_1 = arith.constant 0 : i32
    return %c0_i32, %c0_i32_0 : i32, i32
  }
  func.func @transform_7(%arg0: i32) -> (i32, i32) {
    %c0_i32 = arith.constant 0 : i32
    %c0_i32_0 = arith.constant 0 : i32
    return %arg0, %c0_i32 : i32, i32
  }
}

</mosaic_0001>

<llo_original>
// kernel: tpu_custom_call.1
$region0: #{tpu_custom_call.1}
  #allocation0 [shape = 'u32[]', space=smem, size = 0x4, offset = 0x4, fixed_abs, tag = 'smem constant byte address 0x4 - core index']
  #allocation1 [shape = 'u32[72,128]{1,0:T(1,128)}', space=vmem, size = 0x9000, scoped, tag = 'internal scratch']
  #allocation2 [shape = 'f32[1,1]{1,0:T(1,128)S(1)}', space=vmem, size = 0x200, scoped, tag = 'scoped memory for tpu_custom_call.1']
  %s0 = inlined_call_operand.hbm [shape: f32[8,32], index: 0, kind: input, shape index: {}]
  %s1 = inlined_call_operand.hbm [shape: f32[32,128], index: 1, kind: input, shape index: {}]
  %s2 = inlined_call_operand.vmem [shape: f32[1,128], index: 2, kind: input, shape index: {}]
  %s3 = inlined_call_operand.hbm [shape: f32[128,128], index: 3, kind: input, shape index: {}]
  %s4 = inlined_call_operand.vmem [shape: f32[1,128], index: 4, kind: input, shape index: {}]
  %s5 = inlined_call_operand.vmem [shape: f32[1,128], index: 5, kind: input, shape index: {}]
  %s6 = inlined_call_operand.<no memory space> [shape: f32[1,1], index: 6, kind: input, shape index: {}]
  %s7 = inlined_call_operand.hbm [shape: f32[1,1,8], index: 7, kind: output, shape index: {}]
  %s8 = sld [smem:[#allocation0]]
  $region50: #{tpu_custom_call.1} parent=0
    _
  %s10 = ssub.s32 1, %s8
  %s11 = scalar_select 0, %s10, %s8
  %v12 = vstv %s6
  %13 = vst [vmem:[#allocation2] sm:$0x1] %v12
  $region1: #{tpu_custom_call.1} parent=0
    #allocation3 [shape = 'u8[4096]{0}', space=vmem, size = 0x1000, scoped, tag = 'input window, operand 0, single buffered']
    #allocation4 [shape = 's32[1]{0}', space=sflag, size = 0x4, scoped, tag = 'scoped memory for tpu_custom_call.1']
    #allocation5 [shape = 's32[1]{0}', space=sflag, size = 0x4, scoped, tag = 'scoped memory for tpu_custom_call.1']
    #allocation6 [shape = 'u8[16384]{0}', space=vmem, size = 0x4000, scoped, tag = 'input window, operand 1, single buffered']
    #allocation7 [shape = 's32[1]{0}', space=sflag, size = 0x4, scoped, tag = 'scoped memory for tpu_custom_call.1']
    #allocation8 [shape = 'u8[65536]{0}', space=vmem, size = 0x10000, scoped, tag = 'input window, operand 3, single buffered']
    #allocation9 [shape = 'u8[512]{0}', space=vmem, size = 0x400, scoped, tag = 'output window, operand 0, single buffered']
    %14 = vsyncpa [#allocation4], 0
    %15 = vsyncpa [#allocation7], 0
    %16 = vsyncpa [#allocation5], 0
    // Predicated region
    $region2: #{tpu_custom_call.1} parent=1 // pred_check
      _
    $region3: #{tpu_custom_call.1} parent=1 // pred_check_branch
      %18 = sbr.rel (0) target = $region5
    $region4: #{tpu_custom_call.1} parent=1 // pred_region
      %20 = vsyncadd [#allocation4], 0
      %s22 = sshll.u32 %s0, 4
      %s23 = int_to_ptr.hbm [resolvable:$true] %s22
      %s24 = sshll.u32 [#allocation3], 4
      %s25 = int_to_ptr.vmem [resolvable:$true] %s24
      %27 = dma.hbm_to_vmem [thread:$0]  %s23, 128, %s25, [#allocation4]
    $region5: #{tpu_custom_call.1} parent=1 // pred_fallthru
      _
    // Predicated region
    $region6: #{tpu_custom_call.1} parent=1 // pred_check
      _
    $region7: #{tpu_custom_call.1} parent=1 // pred_check_branch
      %29 = sbr.rel (0) target = $region9
    $region8: #{tpu_custom_call.1} parent=1 // pred_region
      %31 = vsyncadd [#allocation7], 0
      %s32 = sshll.u32 %s1, 4
      %s33 = int_to_ptr.hbm [resolvable:$true] %s32
      %s34 = sshll.u32 [#allocation6], 4
      %s35 = int_to_ptr.vmem [resolvable:$true] %s34
      %40 = dma.hbm_to_vmem [thread:$0]  %s33, 512, %s35, [#allocation7], 128, 128, 8
    $region9: #{tpu_custom_call.1} parent=1 // pred_fallthru
      _
    // Predicated region
    $region10: #{tpu_custom_call.1} parent=1 // pred_check
      _
    $region11: #{tpu_custom_call.1} parent=1 // pred_check_branch
      %42 = sbr.rel (0) target = $region13
    $region12: #{tpu_custom_call.1} parent=1 // pred_region
      _
    $region13: #{tpu_custom_call.1} parent=1 // pred_fallthru
      _
    // Predicated region
    $region14: #{tpu_custom_call.1} parent=1 // pred_check
      _
    $region15: #{tpu_custom_call.1} parent=1 // pred_check_branch
      %44 = sbr.rel (0) target = $region17
    $region16: #{tpu_custom_call.1} parent=1 // pred_region
      %46 = vsyncadd [#allocation7], 0
      %s47 = sshll.u32 %s3, 4
      %s48 = int_to_ptr.hbm [resolvable:$true] %s47
      %s49 = sshll.u32 [#allocation8], 4
      %s50 = int_to_ptr.vmem [resolvable:$true] %s49
      %55 = dma.hbm_to_vmem [thread:$0]  %s48, 2048, %s50, [#allocation7], 128, 128, 8
    $region17: #{tpu_custom_call.1} parent=1 // pred_fallthru
      _
    // Predicated region
    $region18: #{tpu_custom_call.1} parent=1 // pred_check
      _
    $region19: #{tpu_custom_call.1} parent=1 // pred_check_branch
      %57 = sbr.rel (0) target = $region21
    $region20: #{tpu_custom_call.1} parent=1 // pred_region
      _
    $region21: #{tpu_custom_call.1} parent=1 // pred_fallthru
      _
    // Predicated region
    $region22: #{tpu_custom_call.1} parent=1 // pred_check
      _
    $region23: #{tpu_custom_call.1} parent=1 // pred_check_branch
      %59 = sbr.rel (0) target = $region25
    $region24: #{tpu_custom_call.1} parent=1 // pred_region
      _
    $region25: #{tpu_custom_call.1} parent=1 // pred_fallthru
      _
    // Predicated region
    $region26: #{tpu_custom_call.1} parent=1 // pred_check
      _
    $region27: #{tpu_custom_call.1} parent=1 // pred_check_branch
      %61 = sbr.rel (0) target = $region29
    $region28: #{tpu_custom_call.1} parent=1 // pred_region
      _
    $region29: #{tpu_custom_call.1} parent=1 // pred_fallthru
      _
    // Predicated region
    $region30: #{tpu_custom_call.1} parent=1 // pred_check
      _
    $region31: #{tpu_custom_call.1} parent=1 // pred_check_branch
      %63 = sbr.rel (0) target = $region33
    $region32: #{tpu_custom_call.1} parent=1 // pred_region
      %65 = dma.done [#allocation4], 128
    $region33: #{tpu_custom_call.1} parent=1 // pred_fallthru
      _
    // Predicated region
    $region34: #{tpu_custom_call.1} parent=1 // pred_check
      _
    $region35: #{tpu_custom_call.1} parent=1 // pred_check_branch
      %67 = sbr.rel (0) target = $region37
    $region36: #{tpu_custom_call.1} parent=1 // pred_region
      %69 = dma.done [#allocation7], 512
    $region37: #{tpu_custom_call.1} parent=1 // pred_fallthru
      _
    // Predicated region
    $region38: #{tpu_custom_call.1} parent=1 // pred_check
      _
    $region39: #{tpu_custom_call.1} parent=1 // pred_check_branch
      %71 = sbr.rel (0) target = $region41
    $region40: #{tpu_custom_call.1} parent=1 // pred_region
      %73 = dma.done [#allocation7], 2048
    $region41: #{tpu_custom_call.1} parent=1 // pred_fallthru
      _
    %v74 = vld [vmem:[#allocation3] sm:$0xff]
    %v75 = vld [vmem:[#allocation6] sm:$0xff]
    %v76 = vld [vmem:[#allocation6 + $0x8] sm:$0xff]
    %v77 = vld [vmem:[#allocation6 + $0x10] sm:$0xff]
    %v78 = vld [vmem:[#allocation6 + $0x18] sm:$0xff]
    %v79 = vld [vmem:[%s2] sm:$0x1]
    %v81 = vperm.slane %v79, 0
    %vm83 = vcmask 261120
    %v85 = vsel %vm83, %v74, 0
    %87 = vmatpush.msra.mxu0 0.0
    %88 = vmatpush.msra.mxu0 0.0
    %89 = vmatpush.msra.mxu0 0.0
    %90 = vmatpush.msra.mxu0 0.0
    %91 = vmatpush.msra.mxu0 0.0
    %92 = vmatpush.msra.mxu0 0.0
    %93 = vmatpush.msra.mxu0 0.0
    %94 = vmatpush.msra.mxu0 0.0
    %95 = vmatpush.msra.mxu0 0.0
    %96 = vmatpush.msra.mxu0 0.0
    %97 = vmatpush.msra.mxu0 0.0
    %98 = vmatpush.msra.mxu0 0.0
    %99 = vmatpush.msra.mxu0 %v78
    %100 = vmatpush.msra.mxu0 %v77
    %101 = vmatpush.msra.mxu0 %v76
    %102 = vmatpush.msra.mxu0 %v75
    %103 = vmatmul.f32.gmra.mxu0 %v85
    %v104 = vpop.f32.mrf.mxu0
    %v105 = vadd.f32 %v81, %v104
    %106 = vdwg.mxu0
    %v107 = vmax.f32 %v105, 0.0
    %v108 = vld [vmem:[#allocation8] sm:$0xff]
    %v109 = vld [vmem:[#allocation8 + $0x8] sm:$0xff]
    %v110 = vld [vmem:[#allocation8 + $0x10] sm:$0xff]
    %v111 = vld [vmem:[#allocation8 + $0x18] sm:$0xff]
    %v112 = vld [vmem:[#allocation8 + $0x20] sm:$0xff]
    %v113 = vld [vmem:[#allocation8 + $0x28] sm:$0xff]
    %v114 = vld [vmem:[#allocation8 + $0x30] sm:$0xff]
    %v115 = vld [vmem:[#allocation8 + $0x38] sm:$0xff]
    %v116 = vld [vmem:[#allocation8 + $0x40] sm:$0xff]
    %v117 = vld [vmem:[#allocation8 + $0x48] sm:$0xff]
    %v118 = vld [vmem:[#allocation8 + $0x50] sm:$0xff]
    %v119 = vld [vmem:[#allocation8 + $0x58] sm:$0xff]
    %v120 = vld [vmem:[#allocation8 + $0x60] sm:$0xff]
    %v121 = vld [vmem:[#allocation8 + $0x68] sm:$0xff]
    %v122 = vld [vmem:[#allocation8 + $0x70] sm:$0xff]
    %v123 = vld [vmem:[#allocation8 + $0x78] sm:$0xff]
    %v124 = vld [vmem:[%s4] sm:$0x1]
    %v126 = vperm.slane %v124, 0
    %128 = vmatpush.msra.mxu0 %v123
    %129 = vmatpush.msra.mxu0 %v122
    %130 = vmatpush.msra.mxu0 %v121
    %131 = vmatpush.msra.mxu0 %v120
    %132 = vmatpush.msra.mxu0 %v119
    %133 = vmatpush.msra.mxu0 %v118
    %134 = vmatpush.msra.mxu0 %v117
    %135 = vmatpush.msra.mxu0 %v116
    %136 = vmatpush.msra.mxu0 %v115
    %137 = vmatpush.msra.mxu0 %v114
    %138 = vmatpush.msra.mxu0 %v113
    %139 = vmatpush.msra.mxu0 %v112
    %140 = vmatpush.msra.mxu0 %v111
    %141 = vmatpush.msra.mxu0 %v110
    %142 = vmatpush.msra.mxu0 %v109
    %143 = vmatpush.msra.mxu0 %v108
    %144 = vmatmul.f32.gmra.mxu0 %v107
    %v145 = vpop.f32.mrf.mxu0
    %v146 = vadd.f32 %v126, %v145
    %147 = vdwg.mxu0
    %v148 = vmax.f32 %v146, 0.0
    %v149 = vld [vmem:[%s5] sm:$0x1]
    %v151 = vperm.slane %v149, 0
    %v153 = vmul.f32 %v148, %v151
    %154 = vadd.xlane.f32.xlu0 %v153
    %v155 = vpop.xlane.xlu0 %154
    %v156 = vld [vmem:[#allocation2] sm:$0x1]
    %v158 = vperm.slane %v156, 0
    %v160 = vadd.f32 %v155, %v158
    %161 = vxpose.xlu0.b32.start [1/16] %v160, 128
    %162 = vxpose.xlu0.b32.cont [2/16] 0.0, 128
    %163 = vxpose.xlu0.b32.cont [3/16] 0.0, 128
    %164 = vxpose.xlu0.b32.cont [4/16] 0.0, 128
    %165 = vxpose.xlu0.b32.cont [5/16] 0.0, 128
    %166 = vxpose.xlu0.b32.cont [6/16] 0.0, 128
    %167 = vxpose.xlu0.b32.cont [7/16] 0.0, 128
    %168 = vxpose.xlu0.b32.cont [8/16] 0.0, 128
    %169 = vxpose.xlu0.b32.cont [9/16] 0.0, 128
    %170 = vxpose.xlu0.b32.cont [10/16] 0.0, 128
    %171 = vxpose.xlu0.b32.cont [11/16] 0.0, 128
    %172 = vxpose.xlu0.b32.cont [12/16] 0.0, 128
    %173 = vxpose.xlu0.b32.cont [13/16] 0.0, 128
    %174 = vxpose.xlu0.b32.cont [14/16] 0.0, 128
    %175 = vxpose.xlu0.b32.cont [15/16] 0.0, 128
    %176 = vxpose.xlu0.b32.end [16/16] 0.0, 128
    %v177 = vpop.trf.xlu0
    %v178 = vpop.trf.xlu0
    %v179 = vpop.trf.xlu0
    %v180 = vpop.trf.xlu0
    %v181 = vpop.trf.xlu0
    %v182 = vpop.trf.xlu0
    %v183 = vpop.trf.xlu0
    %v184 = vpop.trf.xlu0
    %v185 = vpop.trf.xlu0
    %v186 = vpop.trf.xlu0
    %v187 = vpop.trf.xlu0
    %v188 = vpop.trf.xlu0
    %v189 = vpop.trf.xlu0
    %v190 = vpop.trf.xlu0
    %v191 = vpop.trf.xlu0
    %v192 = vpop.trf.xlu0
    %v193 = vxor.u32 %v177, 2147483648
    %v194 = vmul.f32 %v193, 1.442695
    %v195 = vpow.pop %v194
    %v196 = vadd.f32 %v195, 1.0
    %v197 = vrcp.pop %v196
    %v198 = vmul.f32 %v196, %v197
    %v199 = vsub.f32 1.0, %v198
    %v200 = vmul.f32 %v197, %v199
    %v201 = vadd.f32 %v197, %v200
    %vm202 = vweird.f32 %v196
    %vm203 = vweird.f32 %v197
    %vm204 = vmor %vm202, %vm203
    %v205 = vsel %vm204, %v197, %v201
    %v206 = vand.u32 2147483647, %v196
    %vm207 = vcmp.eq.f32.partialorder %v206, 8.507059e+37
    %v208 = vand.u32 %v196, 2147483648
    %v209 = vor.u32 1.1754944e-38, %v208
    %v210 = vsel %vm207, %v209, %v205
    %v211 = vmul.f32 1.0, %v210
    %vm212 = vcmask 57344
    %213 = vst.msk [vmem:[#allocation9] sm:$0x1] %vm212, %v211
    // Predicated region
    $region42: #{tpu_custom_call.1} parent=1 // pred_check
      _
    $region43: #{tpu_custom_call.1} parent=1 // pred_check_branch
      %215 = sbr.rel (0) target = $region45
    $region44: #{tpu_custom_call.1} parent=1 // pred_region
      %217 = vsyncadd [#allocation5], 0
      %s219 = sshll.u32 [#allocation9], 4
      %s220 = int_to_ptr.vmem [resolvable:$true] %s219
      %s221 = sshll.u32 %s7, 4
      %s222 = int_to_ptr.hbm [resolvable:$true] %s221
      %224 = dma.vmem_to_hbm [thread:$0]  %s220, 16, %s222, [#allocation5]
    $region45: #{tpu_custom_call.1} parent=1 // pred_fallthru
      _
    // Predicated region
    $region46: #{tpu_custom_call.1} parent=1 // pred_check
      _
    $region47: #{tpu_custom_call.1} parent=1 // pred_check_branch
      %226 = sbr.rel (0) target = $region49
    $region48: #{tpu_custom_call.1} parent=1 // pred_region
      %228 = dma.done [#allocation5], 16
    $region49: #{tpu_custom_call.1} parent=1 // pred_fallthru
      _
    %229 = vsyncpa [#allocation4], 1
    %230 = vsyncpa [#allocation7], 1
    %231 = vsyncpa [#allocation5], 1

// kernel: tpu_custom_call.1
$region0: #{tpu_custom_call.1}
  #allocation0 [shape = 'u32[]', space=smem, size = 0x4, offset = 0x4, fixed_abs, tag = 'smem constant byte address 0x4 - core index']
  #allocation1 [shape = 'u32[72,128]{1,0:T(1,128)}', space=vmem, size = 0x9000, scoped, tag = 'internal scratch']
  #allocation2 [shape = 'f32[1,1]{1,0:T(1,128)S(1)}', space=vmem, size = 0x200, scoped, tag = 'scoped memory for tpu_custom_call.1']
  %s0 = inlined_call_operand.hbm [shape: f32[8,32], index: 0, kind: input, shape index: {}]
  %s1 = inlined_call_operand.hbm [shape: f32[32,128], index: 1, kind: input, shape index: {}]
  %s2 = inlined_call_operand.vmem [shape: f32[1,128], index: 2, kind: input, shape index: {}]
  %s3 = inlined_call_operand.hbm [shape: f32[128,128], index: 3, kind: input, shape index: {}]
  %s4 = inlined_call_operand.vmem [shape: f32[1,128], index: 4, kind: input, shape index: {}]
  %s5 = inlined_call_operand.vmem [shape: f32[1,128], index: 5, kind: input, shape index: {}]
  %s6 = inlined_call_operand.<no memory space> [shape: f32[1,1], index: 6, kind: input, shape index: {}]
  %s7 = inlined_call_operand.hbm [shape: f32[1,1,8], index: 7, kind: output, shape index: {}]
  %s8 = sld [smem:[#allocation0]]
  $region50: #{tpu_custom_call.1} parent=0
    _
  %s10 = ssub.s32 1, %s8
  %s11 = scalar_select 0, %s10, %s8
  %v12 = vstv %s6
  %13 = vst [vmem:[#allocation2] sm:$0x1] %v12
  $region1: #{tpu_custom_call.1} parent=0
    #allocation3 [shape = 'u8[4096]{0}', space=vmem, size = 0x1000, scoped, tag = 'input window, operand 0, single buffered']
    #allocation4 [shape = 's32[1]{0}', space=sflag, size = 0x4, scoped, tag = 'scoped memory for tpu_custom_call.1']
    #allocation5 [shape = 's32[1]{0}', space=sflag, size = 0x4, scoped, tag = 'scoped memory for tpu_custom_call.1']
    #allocation6 [shape = 'u8[16384]{0}', space=vmem, size = 0x4000, scoped, tag = 'input window, operand 1, single buffered']
    #allocation7 [shape = 's32[1]{0}', space=sflag, size = 0x4, scoped, tag = 'scoped memory for tpu_custom_call.1']
    #allocation8 [shape = 'u8[65536]{0}', space=vmem, size = 0x10000, scoped, tag = 'input window, operand 3, single buffered']
    #allocation9 [shape = 'u8[512]{0}', space=vmem, size = 0x400, scoped, tag = 'output window, operand 0, single buffered']
    %14 = vsyncpa [#allocation4], 0
    %15 = vsyncpa [#allocation7], 0
    %16 = vsyncpa [#allocation5], 0
    // Predicated region
    $region2: #{tpu_custom_call.1} parent=1 // pred_check
      _
    $region3: #{tpu_custom_call.1} parent=1 // pred_check_branch
      %18 = sbr.rel (0) target = $region5
    $region4: #{tpu_custom_call.1} parent=1 // pred_region
      %20 = vsyncadd [#allocation4], 0
      %s22 = sshll.u32 %s0, 4
      %s23 = int_to_ptr.hbm [resolvable:$true] %s22
      %s24 = sshll.u32 [#allocation3], 4
      %s25 = int_to_ptr.vmem [resolvable:$true] %s24
      %27 = dma.hbm_to_vmem [thread:$0]  %s23, 128, %s25, [#allocation4]
    $region5: #{tpu_custom_call.1} parent=1 // pred_fallthru
      _
    // Predicated region
    $region6: #{tpu_custom_call.1} parent=1 // pred_check
      _
    $region7: #{tpu_custom_call.1} parent=1 // pred_check_branch
      %29 = sbr.rel (0) target = $region9
    $region8: #{tpu_custom_call.1} parent=1 // pred_region
      %31 = vsyncadd [#allocation7], 0
      %s32 = sshll.u32 %s1, 4
      %s33 = int_to_ptr.hbm [resolvable:$true] %s32
      %s34 = sshll.u32 [#allocation6], 4
      %s35 = int_to_ptr.vmem [resolvable:$true] %s34
      %40 = dma.hbm_to_vmem [thread:$0]  %s33, 512, %s35, [#allocation7], 128, 128, 8
    $region9: #{tpu_custom_call.1} parent=1 // pred_fallthru
      _
    // Predicated region
    $region10: #{tpu_custom_call.1} parent=1 // pred_check
      _
    $region11: #{tpu_custom_call.1} parent=1 // pred_check_branch
      %42 = sbr.rel (0) target = $region13
    $region12: #{tpu_custom_call.1} parent=1 // pred_region
      _
    $region13: #{tpu_custom_call.1} parent=1 // pred_fallthru
      _
    // Predicated region
    $region14: #{tpu_custom_call.1} parent=1 // pred_check
      _
    $region15: #{tpu_custom_call.1} parent=1 // pred_check_branch
      %44 = sbr.rel (0) target = $region17
    $region16: #{tpu_custom_call.1} parent=1 // pred_region
      %46 = vsyncadd [#allocation7], 0
      %s47 = sshll.u32 %s3, 4
      %s48 = int_to_ptr.hbm [resolvable:$true] %s47
      %s49 = sshll.u32 [#allocation8], 4
      %s50 = int_to_ptr.vmem [resolvable:$true] %s49
      %55 = dma.hbm_to_vmem [thread:$0]  %s48, 2048, %s50, [#allocation7], 128, 128, 8
    $region17: #{tpu_custom_call.1} parent=1 // pred_fallthru
      _
    // Predicated region
    $region18: #{tpu_custom_call.1} parent=1 // pred_check
      _
    $region19: #{tpu_custom_call.1} parent=1 // pred_check_branch
      %57 = sbr.rel (0) target = $region21
    $region20: #{tpu_custom_call.1} parent=1 // pred_region
      _
    $region21: #{tpu_custom_call.1} parent=1 // pred_fallthru
      _
    // Predicated region
    $region22: #{tpu_custom_call.1} parent=1 // pred_check
      _
    $region23: #{tpu_custom_call.1} parent=1 // pred_check_branch
      %59 = sbr.rel (0) target = $region25
    $region24: #{tpu_custom_call.1} parent=1 // pred_region
      _
    $region25: #{tpu_custom_call.1} parent=1 // pred_fallthru
      _
    // Predicated region
    $region26: #{tpu_custom_call.1} parent=1 // pred_check
      _
    $region27: #{tpu_custom_call.1} parent=1 // pred_check_branch
      %61 = sbr.rel (0) target = $region29
    $region28: #{tpu_custom_call.1} parent=1 // pred_region
      _
    $region29: #{tpu_custom_call.1} parent=1 // pred_fallthru
      _
    // Predicated region
    $region30: #{tpu_custom_call.1} parent=1 // pred_check
      _
    $region31: #{tpu_custom_call.1} parent=1 // pred_check_branch
      %63 = sbr.rel (0) target = $region33
    $region32: #{tpu_custom_call.1} parent=1 // pred_region
      %65 = dma.done [#allocation4], 128
    $region33: #{tpu_custom_call.1} parent=1 // pred_fallthru
      _
    // Predicated region
    $region34: #{tpu_custom_call.1} parent=1 // pred_check
      _
    $region35: #{tpu_custom_call.1} parent=1 // pred_check_branch
      %67 = sbr.rel (0) target = $region37
    $region36: #{tpu_custom_call.1} parent=1 // pred_region
      %69 = dma.done [#allocation7], 512
    $region37: #{tpu_custom_call.1} parent=1 // pred_fallthru
      _
    // Predicated region
    $region38: #{tpu_custom_call.1} parent=1 // pred_check
      _
    $region39: #{tpu_custom_call.1} parent=1 // pred_check_branch
      %71 = sbr.rel (0) target = $region41
    $region40: #{tpu_custom_call.1} parent=1 // pred_region
      %73 = dma.done [#allocation7], 2048
    $region41: #{tpu_custom_call.1} parent=1 // pred_fallthru
      _
    %v74 = vld [vmem:[#allocation3] sm:$0xff]
    %v75 = vld [vmem:[#allocation6] sm:$0xff]
    %v76 = vld [vmem:[#allocation6 + $0x8] sm:$0xff]
    %v77 = vld [vmem:[#allocation6 + $0x10] sm:$0xff]
    %v78 = vld [vmem:[#allocation6 + $0x18] sm:$0xff]
    %v79 = vld [vmem:[%s2] sm:$0x1]
    %v81 = vperm.slane %v79, 0
    %vm83 = vcmask 261120
    %v85 = vsel %vm83, %v74, 0
    %87 = vmatpush.msra.mxu0 0.0
    %88 = vmatpush.msra.mxu0 0.0
    %89 = vmatpush.msra.mxu0 0.0
    %90 = vmatpush.msra.mxu0 0.0
    %91 = vmatpush.msra.mxu0 0.0
    %92 = vmatpush.msra.mxu0 0.0
    %93 = vmatpush.msra.mxu0 0.0
    %94 = vmatpush.msra.mxu0 0.0
    %95 = vmatpush.msra.mxu0 0.0
    %96 = vmatpush.msra.mxu0 0.0
    %97 = vmatpush.msra.mxu0 0.0
    %98 = vmatpush.msra.mxu0 0.0
    %99 = vmatpush.msra.mxu0 %v78
    %100 = vmatpush.msra.mxu0 %v77
    %101 = vmatpush.msra.mxu0 %v76
    %102 = vmatpush.msra.mxu0 %v75
    %103 = vmatmul.f32.gmra.mxu0 %v85
    %v104 = vpop.f32.mrf.mxu0
    %v105 = vadd.f32 %v81, %v104
    %106 = vdwg.mxu0
    %v107 = vmax.f32 %v105, 0.0
    %v108 = vld [vmem:[#allocation8] sm:$0xff]
    %v109 = vld [vmem:[#allocation8 + $0x8] sm:$0xff]
    %v110 = vld [vmem:[#allocation8 + $0x10] sm:$0xff]
    %v111 = vld [vmem:[#allocation8 + $0x18] sm:$0xff]
    %v112 = vld [vmem:[#allocation8 + $0x20] sm:$0xff]
    %v113 = vld [vmem:[#allocation8 + $0x28] sm:$0xff]
    %v114 = vld [vmem:[#allocation8 + $0x30] sm:$0xff]
    %v115 = vld [vmem:[#allocation8 + $0x38] sm:$0xff]
    %v116 = vld [vmem:[#allocation8 + $0x40] sm:$0xff]
    %v117 = vld [vmem:[#allocation8 + $0x48] sm:$0xff]
    %v118 = vld [vmem:[#allocation8 + $0x50] sm:$0xff]
    %v119 = vld [vmem:[#allocation8 + $0x58] sm:$0xff]
    %v120 = vld [vmem:[#allocation8 + $0x60] sm:$0xff]
    %v121 = vld [vmem:[#allocation8 + $0x68] sm:$0xff]
    %v122 = vld [vmem:[#allocation8 + $0x70] sm:$0xff]
    %v123 = vld [vmem:[#allocation8 + $0x78] sm:$0xff]
    %v124 = vld [vmem:[%s4] sm:$0x1]
    %v126 = vperm.slane %v124, 0
    %128 = vmatpush.msra.mxu0 %v123
    %129 = vmatpush.msra.mxu0 %v122
    %130 = vmatpush.msra.mxu0 %v121
    %131 = vmatpush.msra.mxu0 %v120
    %132 = vmatpush.msra.mxu0 %v119
    %133 = vmatpush.msra.mxu0 %v118
    %134 = vmatpush.msra.mxu0 %v117
    %135 = vmatpush.msra.mxu0 %v116
    %136 = vmatpush.msra.mxu0 %v115
    %137 = vmatpush.msra.mxu0 %v114
    %138 = vmatpush.msra.mxu0 %v113
    %139 = vmatpush.msra.mxu0 %v112
    %140 = vmatpush.msra.mxu0 %v111
    %141 = vmatpush.msra.mxu0 %v110
    %142 = vmatpush.msra.mxu0 %v109
    %143 = vmatpush.msra.mxu0 %v108
    %144 = vmatmul.f32.gmra.mxu0 %v107
    %v145 = vpop.f32.mrf.mxu0
    %v146 = vadd.f32 %v126, %v145
    %147 = vdwg.mxu0
    %v148 = vmax.f32 %v146, 0.0
    %v149 = vld [vmem:[%s5] sm:$0x1]
    %v151 = vperm.slane %v149, 0
    %v153 = vmul.f32 %v148, %v151
    %154 = vadd.xlane.f32.xlu0 %v153
    %v155 = vpop.xlane.xlu0 %154
    %v156 = vld [vmem:[#allocation2] sm:$0x1]
    %v158 = vperm.slane %v156, 0
    %v160 = vadd.f32 %v155, %v158
    %161 = vxpose.xlu0.b32.start [1/16] %v160, 128
    %162 = vxpose.xlu0.b32.cont [2/16] 0.0, 128
    %163 = vxpose.xlu0.b32.cont [3/16] 0.0, 128
    %164 = vxpose.xlu0.b32.cont [4/16] 0.0, 128
    %165 = vxpose.xlu0.b32.cont [5/16] 0.0, 128
    %166 = vxpose.xlu0.b32.cont [6/16] 0.0, 128
    %167 = vxpose.xlu0.b32.cont [7/16] 0.0, 128
    %168 = vxpose.xlu0.b32.cont [8/16] 0.0, 128
    %169 = vxpose.xlu0.b32.cont [9/16] 0.0, 128
    %170 = vxpose.xlu0.b32.cont [10/16] 0.0, 128
    %171 = vxpose.xlu0.b32.cont [11/16] 0.0, 128
    %172 = vxpose.xlu0.b32.cont [12/16] 0.0, 128
    %173 = vxpose.xlu0.b32.cont [13/16] 0.0, 128
    %174 = vxpose.xlu0.b32.cont [14/16] 0.0, 128
    %175 = vxpose.xlu0.b32.cont [15/16] 0.0, 128
    %176 = vxpose.xlu0.b32.end [16/16] 0.0, 128
    %v177 = vpop.trf.xlu0
    %v178 = vpop.trf.xlu0
    %v179 = vpop.trf.xlu0
    %v180 = vpop.trf.xlu0
    %v181 = vpop.trf.xlu0
    %v182 = vpop.trf.xlu0
    %v183 = vpop.trf.xlu0
    %v184 = vpop.trf.xlu0
    %v185 = vpop.trf.xlu0
    %v186 = vpop.trf.xlu0
    %v187 = vpop.trf.xlu0
    %v188 = vpop.trf.xlu0
    %v189 = vpop.trf.xlu0
    %v190 = vpop.trf.xlu0
    %v191 = vpop.trf.xlu0
    %v192 = vpop.trf.xlu0
    %v193 = vxor.u32 %v177, 2147483648
    %v194 = vmul.f32 %v193, 1.442695
    %v195 = vpow.pop %v194
    %v196 = vadd.f32 %v195, 1.0
    %v197 = vrcp.pop %v196
    %v198 = vmul.f32 %v196, %v197
    %v199 = vsub.f32 1.0, %v198
    %v200 = vmul.f32 %v197, %v199
    %v201 = vadd.f32 %v197, %v200
    %vm202 = vweird.f32 %v196
    %vm203 = vweird.f32 %v197
    %vm204 = vmor %vm202, %vm203
    %v205 = vsel %vm204, %v197, %v201
    %v206 = vand.u32 2147483647, %v196
    %vm207 = vcmp.eq.f32.partialorder %v206, 8.507059e+37
    %v208 = vand.u32 %v196, 2147483648
    %v209 = vor.u32 1.1754944e-38, %v208
    %v210 = vsel %vm207, %v209, %v205
    %v211 = vmul.f32 1.0, %v210
    %vm212 = vcmask 57344
    %213 = vst.msk [vmem:[#allocation9] sm:$0x1] %vm212, %v211
    // Predicated region
    $region42: #{tpu_custom_call.1} parent=1 // pred_check
      _
    $region43: #{tpu_custom_call.1} parent=1 // pred_check_branch
      %215 = sbr.rel (0) target = $region45
    $region44: #{tpu_custom_call.1} parent=1 // pred_region
      %217 = vsyncadd [#allocation5], 0
      %s219 = sshll.u32 [#allocation9], 4
      %s220 = int_to_ptr.vmem [resolvable:$true] %s219
      %s221 = sshll.u32 %s7, 4
      %s222 = int_to_ptr.hbm [resolvable:$true] %s221
      %224 = dma.vmem_to_hbm [thread:$0]  %s220, 16, %s222, [#allocation5]
    $region45: #{tpu_custom_call.1} parent=1 // pred_fallthru
      _
    // Predicated region
    $region46: #{tpu_custom_call.1} parent=1 // pred_check
      _
    $region47: #{tpu_custom_call.1} parent=1 // pred_check_branch
      %226 = sbr.rel (0) target = $region49
    $region48: #{tpu_custom_call.1} parent=1 // pred_region
      %228 = dma.done [#allocation5], 16
    $region49: #{tpu_custom_call.1} parent=1 // pred_fallthru
      _
    %229 = vsyncpa [#allocation4], 1
    %230 = vsyncpa [#allocation7], 1
    %231 = vsyncpa [#allocation5], 1

// kernel: tpu_custom_call.1
$region0: #{tpu_custom_call.1}
  #allocation0 [shape = 'u32[]', space=smem, size = 0x4, offset = 0x4, fixed_abs, tag = 'smem constant byte address 0x4 - core index']
  #allocation1 [shape = 'u32[72,128]{1,0:T(1,128)}', space=vmem, size = 0x9000, scoped, tag = 'internal scratch']
  #allocation2 [shape = 'f32[1,1]{1,0:T(1,128)S(1)}', space=vmem, size = 0x200, scoped, tag = 'scoped memory for tpu_custom_call.1']
  %s0 = inlined_call_operand.hbm [shape: f32[8,32], index: 0, kind: input, shape index: {}]
  %s1 = inlined_call_operand.hbm [shape: f32[32,128], index: 1, kind: input, shape index: {}]
  %s2 = inlined_call_operand.vmem [shape: f32[1,128], index: 2, kind: input, shape index: {}]
  %s3 = inlined_call_operand.hbm [shape: f32[128,128], index: 3, kind: input, shape index: {}]
  %s4 = inlined_call_operand.vmem [shape: f32[1,128], index: 4, kind: input, shape index: {}]
  %s5 = inlined_call_operand.vmem [shape: f32[1,128], index: 5, kind: input, shape index: {}]
  %s6 = inlined_call_operand.<no memory space> [shape: f32[1,1], index: 6, kind: input, shape index: {}]
  %s7 = inlined_call_operand.vmem [shape: f32[8,1], index: 7, kind: output, shape index: {}]
  %s8 = sld [smem:[#allocation0]]
  $region50: #{tpu_custom_call.1} parent=0
    _
  %s10 = ssub.s32 1, %s8
  %s11 = scalar_select 0, %s10, %s8
  %v12 = vstv %s6
  %13 = vst [vmem:[#allocation2] sm:$0x1] %v12
  $region1: #{tpu_custom_call.1} parent=0
    #allocation3 [shape = 'u8[4096]{0}', space=vmem, size = 0x1000, scoped, tag = 'input window, operand 0, single buffered']
    #allocation4 [shape = 's32[1]{0}', space=sflag, size = 0x4, scoped, tag = 'scoped memory for tpu_custom_call.1']
    #allocation5 [shape = 'u8[16384]{0}', space=vmem, size = 0x4000, scoped, tag = 'input window, operand 1, single buffered']
    #allocation6 [shape = 's32[1]{0}', space=sflag, size = 0x4, scoped, tag = 'scoped memory for tpu_custom_call.1']
    #allocation7 [shape = 'u8[65536]{0}', space=vmem, size = 0x10000, scoped, tag = 'input window, operand 3, single buffered']
    %14 = vsyncpa [#allocation4], 0
    %15 = vsyncpa [#allocation6], 0
    // Predicated region
    $region2: #{tpu_custom_call.1} parent=1 // pred_check
      _
    $region3: #{tpu_custom_call.1} parent=1 // pred_check_branch
      %17 = sbr.rel (0) target = $region5
    $region4: #{tpu_custom_call.1} parent=1 // pred_region
      %19 = vsyncadd [#allocation4], 0
      %s21 = sshll.u32 %s0, 4
      %s22 = int_to_ptr.hbm [resolvable:$true] %s21
      %s23 = sshll.u32 [#allocation3], 4
      %s24 = int_to_ptr.vmem [resolvable:$true] %s23
      %26 = dma.hbm_to_vmem [thread:$0]  %s22, 128, %s24, [#allocation4]
    $region5: #{tpu_custom_call.1} parent=1 // pred_fallthru
      _
    // Predicated region
    $region6: #{tpu_custom_call.1} parent=1 // pred_check
      _
    $region7: #{tpu_custom_call.1} parent=1 // pred_check_branch
      %28 = sbr.rel (0) target = $region9
    $region8: #{tpu_custom_call.1} parent=1 // pred_region
      %30 = vsyncadd [#allocation6], 0
      %s31 = sshll.u32 %s1, 4
      %s32 = int_to_ptr.hbm [resolvable:$true] %s31
      %s33 = sshll.u32 [#allocation5], 4
      %s34 = int_to_ptr.vmem [resolvable:$true] %s33
      %39 = dma.hbm_to_vmem [thread:$0]  %s32, 512, %s34, [#allocation6], 128, 128, 8
    $region9: #{tpu_custom_call.1} parent=1 // pred_fallthru
      _
    // Predicated region
    $region10: #{tpu_custom_call.1} parent=1 // pred_check
      _
    $region11: #{tpu_custom_call.1} parent=1 // pred_check_branch
      %41 = sbr.rel (0) target = $region13
    $region12: #{tpu_custom_call.1} parent=1 // pred_region
      _
    $region13: #{tpu_custom_call.1} parent=1 // pred_fallthru
      _
    // Predicated region
    $region14: #{tpu_custom_call.1} parent=1 // pred_check
      _
    $region15: #{tpu_custom_call.1} parent=1 // pred_check_branch
      %43 = sbr.rel (0) target = $region17
    $region16: #{tpu_custom_call.1} parent=1 // pred_region
      %45 = vsyncadd [#allocation6], 0
      %s46 = sshll.u32 %s3, 4
      %s47 = int_to_ptr.hbm [resolvable:$true] %s46
      %s48 = sshll.u32 [#allocation7], 4
      %s49 = int_to_ptr.vmem [resolvable:$true] %s48
      %54 = dma.hbm_to_vmem [thread:$0]  %s47, 2048, %s49, [#allocation6], 128, 128, 8
    $region17: #{tpu_custom_call.1} parent=1 // pred_fallthru
      _
    // Predicated region
    $region18: #{tpu_custom_call.1} parent=1 // pred_check
      _
    $region19: #{tpu_custom_call.1} parent=1 // pred_check_branch
      %56 = sbr.rel (0) target = $region21
    $region20: #{tpu_custom_call.1} parent=1 // pred_region
      _
    $region21: #{tpu_custom_call.1} parent=1 // pred_fallthru
      _
    // Predicated region
    $region22: #{tpu_custom_call.1} parent=1 // pred_check
      _
    $region23: #{tpu_custom_call.1} parent=1 // pred_check_branch
      %58 = sbr.rel (0) target = $region25
    $region24: #{tpu_custom_call.1} parent=1 // pred_region
      _
    $region25: #{tpu_custom_call.1} parent=1 // pred_fallthru
      _
    // Predicated region
    $region26: #{tpu_custom_call.1} parent=1 // pred_check
      _
    $region27: #{tpu_custom_call.1} parent=1 // pred_check_branch
      %60 = sbr.rel (0) target = $region29
    $region28: #{tpu_custom_call.1} parent=1 // pred_region
      _
    $region29: #{tpu_custom_call.1} parent=1 // pred_fallthru
      _
    // Predicated region
    $region30: #{tpu_custom_call.1} parent=1 // pred_check
      _
    $region31: #{tpu_custom_call.1} parent=1 // pred_check_branch
      %62 = sbr.rel (0) target = $region33
    $region32: #{tpu_custom_call.1} parent=1 // pred_region
      %64 = dma.done [#allocation4], 128
    $region33: #{tpu_custom_call.1} parent=1 // pred_fallthru
      _
    // Predicated region
    $region34: #{tpu_custom_call.1} parent=1 // pred_check
      _
    $region35: #{tpu_custom_call.1} parent=1 // pred_check_branch
      %66 = sbr.rel (0) target = $region37
    $region36: #{tpu_custom_call.1} parent=1 // pred_region
      %68 = dma.done [#allocation6], 512
    $region37: #{tpu_custom_call.1} parent=1 // pred_fallthru
      _
    // Predicated region
    $region38: #{tpu_custom_call.1} parent=1 // pred_check
      _
    $region39: #{tpu_custom_call.1} parent=1 // pred_check_branch
      %70 = sbr.rel (0) target = $region41
    $region40: #{tpu_custom_call.1} parent=1 // pred_region
      %72 = dma.done [#allocation6], 2048
    $region41: #{tpu_custom_call.1} parent=1 // pred_fallthru
      _
    %v73 = vld [vmem:[#allocation3] sm:$0xff]
    %v74 = vld [vmem:[#allocation5] sm:$0xff]
    %v75 = vld [vmem:[#allocation5 + $0x8] sm:$0xff]
    %v76 = vld [vmem:[#allocation5 + $0x10] sm:$0xff]
    %v77 = vld [vmem:[#allocation5 + $0x18] sm:$0xff]
    %v78 = vld [vmem:[%s2] sm:$0x1]
    %v80 = vperm.slane %v78, 0
    %vm82 = vcmask 261120
    %v84 = vsel %vm82, %v73, 0
    %86 = vmatpush.msra.mxu0 0.0
    %87 = vmatpush.msra.mxu0 0.0
    %88 = vmatpush.msra.mxu0 0.0
    %89 = vmatpush.msra.mxu0 0.0
    %90 = vmatpush.msra.mxu0 0.0
    %91 = vmatpush.msra.mxu0 0.0
    %92 = vmatpush.msra.mxu0 0.0
    %93 = vmatpush.msra.mxu0 0.0
    %94 = vmatpush.msra.mxu0 0.0
    %95 = vmatpush.msra.mxu0 0.0
    %96 = vmatpush.msra.mxu0 0.0
    %97 = vmatpush.msra.mxu0 0.0
    %98 = vmatpush.msra.mxu0 %v77
    %99 = vmatpush.msra.mxu0 %v76
    %100 = vmatpush.msra.mxu0 %v75
    %101 = vmatpush.msra.mxu0 %v74
    %102 = vmatmul.f32.gmra.mxu0 %v84
    %v103 = vpop.f32.mrf.mxu0
    %v104 = vadd.f32 %v80, %v103
    %105 = vdwg.mxu0
    %v106 = vmax.f32 %v104, 0.0
    %v107 = vld [vmem:[#allocation7] sm:$0xff]
    %v108 = vld [vmem:[#allocation7 + $0x8] sm:$0xff]
    %v109 = vld [vmem:[#allocation7 + $0x10] sm:$0xff]
    %v110 = vld [vmem:[#allocation7 + $0x18] sm:$0xff]
    %v111 = vld [vmem:[#allocation7 + $0x20] sm:$0xff]
    %v112 = vld [vmem:[#allocation7 + $0x28] sm:$0xff]
    %v113 = vld [vmem:[#allocation7 + $0x30] sm:$0xff]
    %v114 = vld [vmem:[#allocation7 + $0x38] sm:$0xff]
    %v115 = vld [vmem:[#allocation7 + $0x40] sm:$0xff]
    %v116 = vld [vmem:[#allocation7 + $0x48] sm:$0xff]
    %v117 = vld [vmem:[#allocation7 + $0x50] sm:$0xff]
    %v118 = vld [vmem:[#allocation7 + $0x58] sm:$0xff]
    %v119 = vld [vmem:[#allocation7 + $0x60] sm:$0xff]
    %v120 = vld [vmem:[#allocation7 + $0x68] sm:$0xff]
    %v121 = vld [vmem:[#allocation7 + $0x70] sm:$0xff]
    %v122 = vld [vmem:[#allocation7 + $0x78] sm:$0xff]
    %v123 = vld [vmem:[%s4] sm:$0x1]
    %v125 = vperm.slane %v123, 0
    %127 = vmatpush.msra.mxu0 %v122
    %128 = vmatpush.msra.mxu0 %v121
    %129 = vmatpush.msra.mxu0 %v120
    %130 = vmatpush.msra.mxu0 %v119
    %131 = vmatpush.msra.mxu0 %v118
    %132 = vmatpush.msra.mxu0 %v117
    %133 = vmatpush.msra.mxu0 %v116
    %134 = vmatpush.msra.mxu0 %v115
    %135 = vmatpush.msra.mxu0 %v114
    %136 = vmatpush.msra.mxu0 %v113
    %137 = vmatpush.msra.mxu0 %v112
    %138 = vmatpush.msra.mxu0 %v111
    %139 = vmatpush.msra.mxu0 %v110
    %140 = vmatpush.msra.mxu0 %v109
    %141 = vmatpush.msra.mxu0 %v108
    %142 = vmatpush.msra.mxu0 %v107
    %143 = vmatmul.f32.gmra.mxu0 %v106
    %v144 = vpop.f32.mrf.mxu0
    %v145 = vadd.f32 %v125, %v144
    %146 = vdwg.mxu0
    %v147 = vmax.f32 %v145, 0.0
    %v148 = vld [vmem:[%s5] sm:$0x1]
    %v150 = vperm.slane %v148, 0
    %v152 = vmul.f32 %v147, %v150
    %153 = vadd.xlane.f32.xlu0 %v152
    %v154 = vpop.xlane.xlu0 %153
    %v155 = vld [vmem:[#allocation2] sm:$0x1]
    %v157 = vperm.slane %v155, 0
    %v159 = vadd.f32 %v154, %v157
    %v160 = vxor.u32 %v159, 2147483648
    %v161 = vmul.f32 %v160, 1.442695
    %v162 = vpow.pop %v161
    %v163 = vadd.f32 %v162, 1.0
    %v164 = vrcp.pop %v163
    %v165 = vmul.f32 %v163, %v164
    %v166 = vsub.f32 1.0, %v165
    %v167 = vmul.f32 %v164, %v166
    %v168 = vadd.f32 %v164, %v167
    %vm169 = vweird.f32 %v163
    %vm170 = vweird.f32 %v164
    %vm171 = vmor %vm169, %vm170
    %v172 = vsel %vm171, %v164, %v168
    %v173 = vand.u32 2147483647, %v163
    %vm174 = vcmp.eq.f32.partialorder %v173, 8.507059e+37
    %v175 = vand.u32 %v163, 2147483648
    %v176 = vor.u32 1.1754944e-38, %v175
    %v177 = vsel %vm174, %v176, %v172
    %v178 = vmul.f32 1.0, %v177
    %vm179 = vcmask 7168
    %180 = vst.msk [vmem:[%s7] sm:$0xff] %vm179, %v178
    // Predicated region
    $region42: #{tpu_custom_call.1} parent=1 // pred_check
      _
    $region43: #{tpu_custom_call.1} parent=1 // pred_check_branch
      %182 = sbr.rel (0) target = $region45
    $region44: #{tpu_custom_call.1} parent=1 // pred_region
      _
    $region45: #{tpu_custom_call.1} parent=1 // pred_fallthru
      _
    // Predicated region
    $region46: #{tpu_custom_call.1} parent=1 // pred_check
      _
    $region47: #{tpu_custom_call.1} parent=1 // pred_check_branch
      %184 = sbr.rel (0) target = $region49
    $region48: #{tpu_custom_call.1} parent=1 // pred_region
      _
    $region49: #{tpu_custom_call.1} parent=1 // pred_fallthru
      _
    %185 = vsyncpa [#allocation4], 1
    %186 = vsyncpa [#allocation6], 1

</llo_original>
